<compile_context>
chip_gen: v6e
topology: v6e:2x2x1
jax: 0.10.0
libtpu: 0.0.40
codegen_flags: <defaults>
</compile_context>

<pallas_src>
import jax
import jax.numpy as jnp
from jax.experimental import pallas as pl
from jax.experimental.pallas import tpu as pltpu

VOCAB = 14923
EMB = 300          # nn.Embedding(14923, 300) -> input_size must be 300
HIDDEN = 32        # hidden_size
NUM_CLASSES = 2
SUBLANE = 8


def _round_up(x, m):
    return (x + m - 1) // m * m


def dan_kernel(x_ref, b1_ref, w2_ref, b2_ref, out_ref, acc_ref):
    # x_ref  : [TS, TB, H] streamed pre-projected rows P[idx] (P = emb @ w1 / S)
    # b1_ref : [1, H]    w2_ref : [H, C]    b2_ref : [1, C]
    # out_ref: [TB, C]   acc_ref: [TB, H] f32 scratch (per batch tile)
    s = pl.program_id(1)

    @pl.when(s == 0)
    def _init():
        acc_ref[...] = jnp.zeros_like(acc_ref)

    # Accumulate the sequence sum for this batch tile (VPU work, overlapped
    # with the HBM stream by BlockSpec double-buffering).  Because 1/S and w1
    # are folded into the projected table, acc == mean_S(emb[idx]) @ w1.
    acc_ref[...] += jnp.sum(x_ref[...], axis=0)

    @pl.when(s == pl.num_programs(1) - 1)
    def _finalize():
        h = jnp.maximum(acc_ref[...] + b1_ref[...], 0.0)                    # fc1 + ReLU
        logits = jnp.dot(h, w2_ref[...],
                         preferred_element_type=jnp.float32) + b2_ref[...]  # fc2
        # log_softmax along dim=1
        m = jnp.max(logits, axis=1, keepdims=True)
        z = logits - m
        lse = jnp.log(jnp.sum(jnp.exp(z), axis=1, keepdims=True))
        out_ref[...] = z - lse


def dan_embed_forward(word_indices, emb_table, w1, b1, w2, b2,
                      *, tile_b=256, tile_s=512):
    """word_indices: [S, B] int32 -> log-probs [B, NUM_CLASSES] f32."""
    S, B = word_indices.shape
    V, E = emb_table.shape
    H = w1.shape[1]
    C = w2.shape[1]
    b1 = jnp.asarray(b1).reshape(1, H)
    b2 = jnp.asarray(b2).reshape(1, C)

    # ---- host-side fold: emb_table @ w1 and the 1/S of the mean ------------
    # P[v] = emb_table[v] @ w1 / S  (one-time ~0.3 GFLOP; exact up to fp
    # reordering).  The kernel then only streams/accumulates 32-wide rows.
    proj_table = jnp.dot(emb_table, w1,
                         preferred_element_type=jnp.float32) * (1.0 / S)   # [V, H]

    # TODO(synk): fuse this gather into the kernel (scalar-prefetch indices +
    # VMEM-resident proj_table, ~1.9 MiB) to avoid the [S, B, H] HBM round-trip.
    x = jnp.take(proj_table, word_indices, axis=0)       # [S, B, H] f32

    # ---- tiling (zero-pad S and B so tiles divide evenly) ------------------
    Bp8 = _round_up(B, SUBLANE)
    TB = _round_up(min(tile_b, B), SUBLANE)
    # v7x has 2 TensorCores: ensure the "parallel" batch axis gets >= 2 blocks
    # whenever the padded batch is large enough to split.
    if TB >= Bp8 and Bp8 >= 2 * SUBLANE:
        TB = _round_up(-(-Bp8 // 2), SUBLANE)
    Bp = _round_up(B, TB)

    TS = min(tile_s, S)
    Sp = _round_up(S, TS)

    # Zero rows along S add nothing to the sum (1/S already uses the true S);
    # padded batch rows compute bias-only logits and are sliced off at the end.
    x = jnp.pad(x, ((0, Sp - S), (0, Bp - B), (0, 0)))

    nb = Bp // TB
    ns = Sp // TS

    cost = pl.CostEstimate(
        flops=(Sp * Bp * H                  # sequence-sum accumulation
               + 2 * Bp * H                 # +b1, ReLU
               + 2 * Bp * H * C + Bp * C),  # fc2 (+bias)
        transcendentals=Bp * (C + 1),       # exp + log of log_softmax
        bytes_accessed=(Sp * Bp * H * 4     # streamed projected activations
                        + H * 4 + H * C * 4 + C * 4   # weights/biases
                        + Bp * C * 4),      # output
    )

    out = pl.pallas_call(
        dan_kernel,
        out_shape=jax.ShapeDtypeStruct((Bp, C), jnp.float32),
        grid_spec=pltpu.PrefetchScalarGridSpec(
            num_scalar_prefetch=0,
            grid=(nb, ns),
            in_specs=[
                # Streamed sequence/batch tile (double-buffered by Pallas).
                pl.BlockSpec((TS, TB, H), lambda b, s: (s, b, 0)),
                # Small weights: constant index maps -> VMEM-resident.
                pl.BlockSpec((1, H), lambda b, s: (0, 0)),
                pl.BlockSpec((H, C), lambda b, s: (0, 0)),
                pl.BlockSpec((1, C), lambda b, s: (0, 0)),
            ],
            out_specs=pl.BlockSpec((TB, C), lambda b, s: (b, 0)),
            scratch_shapes=[pltpu.VMEM((TB, H), jnp.float32)],
        ),
        compiler_params=pltpu.CompilerParams(
            dimension_semantics=("parallel", "arbitrary"),
            # ~33 MiB of stream buffers + scratch at default tiles: fits v7x's
            # 64 MiB VMEM and leaves ample headroom on v5e/v6e's 128 MiB.
            vmem_limit_bytes=48 * 1024 * 1024,
        ),
        cost_estimate=cost,
    )(x, b1, w2, b2)

    return out[:B]


def reference_forward(word_indices, emb_table, w1, b1, w2, b2):
    embedded = jnp.take(emb_table, word_indices, axis=0)
    avg = jnp.mean(embedded, axis=0)
    h = jnp.maximum(avg @ w1 + b1, 0.0)
    logits = h @ w2 + b2
    return jax.nn.log_softmax(logits, axis=1)


if __name__ == "__main__":
    key = jax.random.PRNGKey(0)
    k_emb, k_w1, k_b1, k_w2, k_b2, k_idx, k_idx2 = jax.random.split(key, 7)

    # Deterministic synthetic parameters (shapes from the module __init__).
    emb_table = jax.random.normal(k_emb, (VOCAB, EMB), jnp.float32) * 0.1
    w1 = jax.random.normal(k_w1, (EMB, HIDDEN), jnp.float32) * 0.05
    b1 = jax.random.normal(k_b1, (1, HIDDEN), jnp.float32) * 0.05
    w2 = jax.random.normal(k_w2, (HIDDEN, NUM_CLASSES), jnp.float32) * 0.05
    b2 = jax.random.normal(k_b2, (1, NUM_CLASSES), jnp.float32) * 0.05

    # Small example input: seq=8, batch=2 of integer word indices.
    S, B = 8, 2
    word_indices = jax.random.randint(k_idx, (S, B), 0, VOCAB, jnp.int32)

    out = dan_embed_forward(word_indices, emb_table, w1, b1, w2, b2)
    out = jax.block_until_ready(out)
    ref = reference_forward(word_indices, emb_table, w1, b1, w2, b2)
    assert out.shape == (B, NUM_CLASSES)
    assert jnp.allclose(out, ref, rtol=1e-5, atol=1e-5), "mismatch vs reference"

    # Second check exercising multi-tile accumulation over S, batch padding,
    # and the >=2-blocks-on-the-parallel-axis logic (forced small tiles).
    S2, B2 = 96, 20
    word_indices2 = jax.random.randint(k_idx2, (S2, B2), 0, VOCAB, jnp.int32)
    out2 = dan_embed_forward(word_indices2, emb_table, w1, b1, w2, b2,
                             tile_b=64, tile_s=32)
    out2 = jax.block_until_ready(out2)
    ref2 = reference_forward(word_indices2, emb_table, w1, b1, w2, b2)
    assert out2.shape == (B2, NUM_CLASSES)
    assert jnp.allclose(out2, ref2, rtol=1e-5, atol=1e-5), "mismatch vs reference (tiled)"

    print("KERNEL_OK")
</pallas_src>

<mosaic_0001>
module attributes {stable_mosaic.version = 11 : i64} {
  func.func @dan_kernel(%arg0: i32, %arg1: i32, %arg2: memref<8x8x32xf32, #tpu.memory_space<vmem>>, %arg3: memref<1x32xf32, #tpu.memory_space<vmem>>, %arg4: memref<32x2xf32, #tpu.memory_space<vmem>>, %arg5: memref<1x2xf32, #tpu.memory_space<vmem>>, %arg6: memref<8x2xf32, #tpu.memory_space<vmem>>, %arg7: memref<8x32xf32, #tpu.memory_space<vmem>>) attributes {dimension_semantics = [#tpu.dimension_semantics<parallel>, #tpu.dimension_semantics<arbitrary>], iteration_bounds = array<i64: 1, 1>, scalar_prefetch = 0 : i64, scratch_operands = 1 : i64, tpu.core_type = #tpu.core_type<tc>, window_params = [{transform_indices = @transform_0, window_bounds = array<i64: 8, 8, 32>}, {pipeline_mode = #tpu.pipeline_mode<synchronous>, transform_indices = @transform_1, window_bounds = array<i64: 1, 32>}, {pipeline_mode = #tpu.pipeline_mode<synchronous>, transform_indices = @transform_2, window_bounds = array<i64: 32, 2>}, {pipeline_mode = #tpu.pipeline_mode<synchronous>, transform_indices = @transform_3, window_bounds = array<i64: 1, 2>}, {transform_indices = @transform_4, window_bounds = array<i64: 8, 2>}]} {
    %c0_i32 = arith.constant 0 : i32
    %0 = arith.cmpi eq, %arg1, %c0_i32 : i32
    %1 = arith.extui %0 : i1 to i32
    %c0_i32_0 = arith.constant 0 : i32
    %2 = arith.cmpi ne, %1, %c0_i32_0 : i32
    scf.if %2 {
      %cst_9 = arith.constant 0.000000e+00 : f32
      %11 = vector.broadcast %cst_9 : f32 to vector<8x32xf32>
      %c0_10 = arith.constant 0 : index
      %c0_11 = arith.constant 0 : index
      %12 = vector.load %arg7[%c0_10, %c0_11] : memref<8x32xf32, #tpu.memory_space<vmem>>, vector<8x32xf32>
      tpu.vector_store %arg7[%c0_10, %c0_11], %11 {strides = array<i32>} : memref<8x32xf32, #tpu.memory_space<vmem>>, vector<8x32xf32>,
    } else {
    }
    %c0 = arith.constant 0 : index
    %c0_1 = arith.constant 0 : index
    %3 = vector.load %arg7[%c0, %c0_1] : memref<8x32xf32, #tpu.memory_space<vmem>>, vector<8x32xf32>
    %c0_2 = arith.constant 0 : index
    %c0_3 = arith.constant 0 : index
    %c0_4 = arith.constant 0 : index
    %4 = vector.load %arg2[%c0_2, %c0_3, %c0_4] : memref<8x8x32xf32, #tpu.memory_space<vmem>>, vector<8x8x32xf32>
    %cst = arith.constant dense<0.000000e+00> : vector<8x32xf32>
    %5 = vector.multi_reduction <add>, %4, %cst [0] : vector<8x8x32xf32> to vector<8x32xf32>
    %6 = arith.addf %3, %5 : vector<8x32xf32>
    %c0_5 = arith.constant 0 : index
    %c0_6 = arith.constant 0 : index
    %7 = vector.load %arg7[%c0_5, %c0_6] : memref<8x32xf32, #tpu.memory_space<vmem>>, vector<8x32xf32>
    tpu.vector_store %arg7[%c0_5, %c0_6], %6 {strides = array<i32>} : memref<8x32xf32, #tpu.memory_space<vmem>>, vector<8x32xf32>,
    %c0_i32_7 = arith.constant 0 : i32
    %8 = arith.cmpi eq, %arg1, %c0_i32_7 : i32
    %9 = arith.extui %8 : i1 to i32
    %c0_i32_8 = arith.constant 0 : i32
    %10 = arith.cmpi ne, %9, %c0_i32_8 : i32
    scf.if %10 {
      %c0_9 = arith.constant 0 : index
      %c0_10 = arith.constant 0 : index
      %11 = vector.load %arg7[%c0_9, %c0_10] : memref<8x32xf32, #tpu.memory_space<vmem>>, vector<8x32xf32>
      %c0_11 = arith.constant 0 : index
      %c0_12 = arith.constant 0 : index
      %12 = vector.load %arg3[%c0_11, %c0_12] : memref<1x32xf32, #tpu.memory_space<vmem>>, vector<1x32xf32>
      %13 = vector.broadcast %12 : vector<1x32xf32> to vector<8x32xf32>
      %14 = arith.addf %11, %13 : vector<8x32xf32>
      %cst_13 = arith.constant 0.000000e+00 : f32
      %15 = vector.broadcast %cst_13 : f32 to vector<8x32xf32>
      %16 = arith.maximumf %14, %15 : vector<8x32xf32>
      %c0_14 = arith.constant 0 : index
      %c0_15 = arith.constant 0 : index
      %17 = vector.load %arg4[%c0_14, %c0_15] : memref<32x2xf32, #tpu.memory_space<vmem>>, vector<32x2xf32>
      %cst_16 = arith.constant dense<0.000000e+00> : vector<8x2xf32>
      %18 = tpu.matmul %16, %17, %cst_16 {dimension_numbers = #tpu.dot_dimension_numbers<[1], [0], [0], [1], [0, 0, 1, 1], [], []>} : vector<8x32xf32>, vector<32x2xf32>, vector<8x2xf32> -> vector<8x2xf32>
      %c0_17 = arith.constant 0 : index
      %c0_18 = arith.constant 0 : index
      %19 = vector.load %arg5[%c0_17, %c0_18] : memref<1x2xf32, #tpu.memory_space<vmem>>, vector<1x2xf32>
      %20 = vector.broadcast %19 : vector<1x2xf32> to vector<8x2xf32>
      %21 = arith.addf %18, %20 : vector<8x2xf32>
      %cst_19 = arith.constant dense<0xFF800000> : vector<8xf32>
      %22 = vector.multi_reduction <maximumf>, %21, %cst_19 [1] : vector<8x2xf32> to vector<8xf32>
      %23 = vector.shape_cast %22 : vector<8xf32> to vector<8x1xf32>
      %24 = vector.broadcast %23 : vector<8x1xf32> to vector<8x2xf32>
      %25 = arith.subf %21, %24 : vector<8x2xf32>
      %26 = math.exp %25 : vector<8x2xf32>
      %cst_20 = arith.constant dense<0.000000e+00> : vector<8xf32>
      %27 = vector.multi_reduction <add>, %26, %cst_20 [1] : vector<8x2xf32> to vector<8xf32>
      %28 = vector.shape_cast %27 : vector<8xf32> to vector<8x1xf32>
      %29 = math.log %28 : vector<8x1xf32>
      %30 = vector.broadcast %29 : vector<8x1xf32> to vector<8x2xf32>
      %31 = arith.subf %25, %30 : vector<8x2xf32>
      %c0_21 = arith.constant 0 : index
      %c0_22 = arith.constant 0 : index
      %32 = vector.load %arg6[%c0_21, %c0_22] : memref<8x2xf32, #tpu.memory_space<vmem>>, vector<8x2xf32>
      tpu.vector_store %arg6[%c0_21, %c0_22], %31 {strides = array<i32>} : memref<8x2xf32, #tpu.memory_space<vmem>>, vector<8x2xf32>,
    } else {
    }
    return
  }
  func.func @transform_0(%arg0: i32, %arg1: i32) -> (i32, i32, i32) {
    %c0_i32 = arith.constant 0 : i32
    %c0_i32_0 = arith.constant 0 : i32
    return %arg1, %arg0, %c0_i32 : i32, i32, i32
  }
  func.func @transform_1(%arg0: i32, %arg1: i32) -> (i32, i32) {
    %c0_i32 = arith.constant 0 : i32
    %c0_i32_0 = arith.constant 0 : i32
    %c0_i32_1 = arith.constant 0 : i32
    return %c0_i32, %c0_i32_0 : i32, i32
  }
  func.func @transform_2(%arg0: i32, %arg1: i32) -> (i32, i32) {
    %c0_i32 = arith.constant 0 : i32
    %c0_i32_0 = arith.constant 0 : i32
    %c0_i32_1 = arith.constant 0 : i32
    return %c0_i32, %c0_i32_0 : i32, i32
  }
  func.func @transform_3(%arg0: i32, %arg1: i32) -> (i32, i32) {
    %c0_i32 = arith.constant 0 : i32
    %c0_i32_0 = arith.constant 0 : i32
    %c0_i32_1 = arith.constant 0 : i32
    return %c0_i32, %c0_i32_0 : i32, i32
  }
  func.func @transform_4(%arg0: i32, %arg1: i32) -> (i32, i32) {
    %c0_i32 = arith.constant 0 : i32
    %c0_i32_0 = arith.constant 0 : i32
    return %arg0, %c0_i32 : i32, i32
  }
}

</mosaic_0001>

<llo_original>
// kernel: tpu_custom_call.1
$region0: #{tpu_custom_call.1}
  #allocation0 [shape = 'u32[]', space=smem, size = 0x4, offset = 0x4, fixed_abs, tag = 'smem constant byte address 0x4 - core index']
  #allocation1 [shape = 'u32[144,128]{1,0:T(1,128)}', space=vmem, size = 0x12000, scoped, tag = 'internal scratch']
  #allocation2 [shape = 'f32[8,32]{1,0:T(8,128)}', space=vmem, size = 0x1000, scoped, tag = 'scratch operand']
  %s0 = inlined_call_operand.hbm [shape: f32[8,8,32], index: 0, kind: input, shape index: {}]
  %s1 = inlined_call_operand.vmem [shape: f32[1,32], index: 1, kind: input, shape index: {}]
  %s2 = inlined_call_operand.vmem [shape: f32[32,2], index: 2, kind: input, shape index: {}]
  %s3 = inlined_call_operand.vmem [shape: f32[1,2], index: 3, kind: input, shape index: {}]
  %s4 = inlined_call_operand.vmem [shape: f32[8,2], index: 4, kind: output, shape index: {}]
  %s5 = sld [smem:[#allocation0]]
  $region38: #{tpu_custom_call.1} parent=0
    _
  %s7 = ssub.s32 1, %s5
  %s8 = scalar_select 0, %s7, %s5
  $region1: #{tpu_custom_call.1} parent=0
    #allocation3 [shape = 'u8[32768]{0}', space=vmem, size = 0x8000, scoped, tag = 'input window, operand 0, single buffered']
    #allocation4 [shape = 's32[1]{0}', space=sflag, size = 0x4, scoped, tag = 'scoped memory for tpu_custom_call.1']
    %9 = vsyncpa [#allocation4], 0
    // Predicated region
    $region2: #{tpu_custom_call.1} parent=1 // pred_check
      _
    $region3: #{tpu_custom_call.1} parent=1 // pred_check_branch
      %11 = sbr.rel (0) target = $region5
    $region4: #{tpu_custom_call.1} parent=1 // pred_region
      %s13 = ssub.s32 1024, 1024
      %14 = vsyncadd [#allocation4], %s13
      %s15 = sshll.u32 [#allocation3], 4
      %s16 = int_to_ptr.vmem [resolvable:$true] %s15
      %21 = dma.hbm_to_vmem [thread:$0]  %s0, 1024, %s16, [#allocation4], 128, 128, 8
    $region5: #{tpu_custom_call.1} parent=1 // pred_fallthru
      _
    // Predicated region
    $region6: #{tpu_custom_call.1} parent=1 // pred_check
      _
    $region7: #{tpu_custom_call.1} parent=1 // pred_check_branch
      %23 = sbr.rel (0) target = $region9
    $region8: #{tpu_custom_call.1} parent=1 // pred_region
      _
    $region9: #{tpu_custom_call.1} parent=1 // pred_fallthru
      _
    // Predicated region
    $region10: #{tpu_custom_call.1} parent=1 // pred_check
      _
    $region11: #{tpu_custom_call.1} parent=1 // pred_check_branch
      %25 = sbr.rel (0) target = $region13
    $region12: #{tpu_custom_call.1} parent=1 // pred_region
      _
    $region13: #{tpu_custom_call.1} parent=1 // pred_fallthru
      _
    // Predicated region
    $region14: #{tpu_custom_call.1} parent=1 // pred_check
      _
    $region15: #{tpu_custom_call.1} parent=1 // pred_check_branch
      %27 = sbr.rel (0) target = $region17
    $region16: #{tpu_custom_call.1} parent=1 // pred_region
      _
    $region17: #{tpu_custom_call.1} parent=1 // pred_fallthru
      _
    // Predicated region
    $region18: #{tpu_custom_call.1} parent=1 // pred_check
      _
    $region19: #{tpu_custom_call.1} parent=1 // pred_check_branch
      %29 = sbr.rel (0) target = $region21
    $region20: #{tpu_custom_call.1} parent=1 // pred_region
      %30 = dma.done [#allocation4], 1024
    $region21: #{tpu_custom_call.1} parent=1 // pred_fallthru
      _
    %p31 = scmp.eq.s32.totalorder 0, 0
    // Predicated region
    $region22: #{tpu_custom_call.1} parent=1 // pred_check
      %p32 = pneg %p31
    $region23: #{tpu_custom_call.1} parent=1 // pred_check_branch
      %34 = sbr.rel (%p32) target = $region25
    $region24: #{tpu_custom_call.1} parent=1 // pred_region
      %vm35 = vcmask 261120
      %36 = vst.msk [vmem:[#allocation2] sm:$0xff] %vm35, 0.0
    $region25: #{tpu_custom_call.1} parent=1 // pred_fallthru
      _
    %v37 = vld [vmem:[#allocation2] sm:$0xff]
    %v38 = vld [vmem:[#allocation3] sm:$0xff]
    %v39 = vld [vmem:[#allocation3 + $0x8] sm:$0xff]
    %v40 = vld [vmem:[#allocation3 + $0x10] sm:$0xff]
    %v41 = vld [vmem:[#allocation3 + $0x18] sm:$0xff]
    %v42 = vld [vmem:[#allocation3 + $0x20] sm:$0xff]
    %v43 = vld [vmem:[#allocation3 + $0x28] sm:$0xff]
    %v44 = vld [vmem:[#allocation3 + $0x30] sm:$0xff]
    %v45 = vld [vmem:[#allocation3 + $0x38] sm:$0xff]
    %vm46 = vcmask 261120
    %v47 = vsel %vm46, %v38, 0.0
    %v48 = vsel %vm46, %v39, 0.0
    %v49 = vadd.f32 %v47, %v48
    %v50 = vsel %vm46, %v40, 0.0
    %v51 = vadd.f32 %v49, %v50
    %v52 = vsel %vm46, %v41, 0.0
    %v53 = vadd.f32 %v51, %v52
    %v54 = vsel %vm46, %v42, 0.0
    %v55 = vadd.f32 %v53, %v54
    %v56 = vsel %vm46, %v43, 0.0
    %v57 = vadd.f32 %v55, %v56
    %v58 = vsel %vm46, %v44, 0.0
    %v59 = vadd.f32 %v57, %v58
    %v60 = vsel %vm46, %v45, 0.0
    %v61 = vadd.f32 %v59, %v60
    %v62 = vadd.f32 %v37, %v61
    %63 = vst.msk [vmem:[#allocation2] sm:$0xff] %vm46, %v62
    // Predicated region
    $region26: #{tpu_custom_call.1} parent=1 // pred_check
      %p64 = pneg %p31
    $region27: #{tpu_custom_call.1} parent=1 // pred_check_branch
      %66 = sbr.rel (%p64) target = $region29
    $region28: #{tpu_custom_call.1} parent=1 // pred_region
      %v67 = vld [vmem:[#allocation2] sm:$0xff]
      %v68 = vld [vmem:[%s1] sm:$0x1]
      %v70 = vlaneseq
      %v71 = vshrl.u32 %v70, 7
      %v72 = vsub.s32 0, %v71
      %v73 = vrot.slane %v68, %v72
      %v75 = vadd.f32 %v67, %v73
      %v76 = vmax.f32 %v75, 0.0
      %v77 = vld [vmem:[%s2] sm:$0xff]
      %v78 = vld [vmem:[%s2 + $0x8] sm:$0xff]
      %v79 = vld [vmem:[%s2 + $0x10] sm:$0xff]
      %v80 = vld [vmem:[%s2 + $0x18] sm:$0xff]
      %v81 = vld [vmem:[%s3] sm:$0x1]
      %v83 = vlaneseq
      %v84 = vshrl.u32 %v83, 7
      %v85 = vsub.s32 0, %v84
      %v86 = vrot.slane %v81, %v85
      %v89 = vsel %vm46, %v76, 0
      %91 = vmatprep.subr.mxu0 0.0
      %92 = vmatpush1.msra.mxu0 0.0
      %93 = vmatprep.subr.mxu0 0.0
      %94 = vmatpush1.msra.mxu0 0.0
      %95 = vmatprep.subr.mxu0 0.0
      %96 = vmatpush1.msra.mxu0 0.0
      %97 = vmatprep.subr.mxu0 0.0
      %98 = vmatpush1.msra.mxu0 0.0
      %99 = vmatprep.subr.mxu0 0.0
      %100 = vmatpush1.msra.mxu0 0.0
      %101 = vmatprep.subr.mxu0 0.0
      %102 = vmatpush1.msra.mxu0 0.0
      %103 = vmatprep.subr.mxu0 0.0
      %104 = vmatpush1.msra.mxu0 0.0
      %105 = vmatprep.subr.mxu0 0.0
      %106 = vmatpush1.msra.mxu0 0.0
      %107 = vmatprep.subr.mxu0 0.0
      %108 = vmatpush1.msra.mxu0 0.0
      %109 = vmatprep.subr.mxu0 0.0
      %110 = vmatpush1.msra.mxu0 0.0
      %111 = vmatprep.subr.mxu0 0.0
      %112 = vmatpush1.msra.mxu0 0.0
      %113 = vmatprep.subr.mxu0 0.0
      %114 = vmatpush1.msra.mxu0 0.0
      %115 = vmatprep.subr.mxu0 0.0
      %116 = vmatpush1.msra.mxu0 %v80
      %117 = vmatprep.subr.mxu0 0.0
      %118 = vmatpush1.msra.mxu0 %v79
      %119 = vmatprep.subr.mxu0 0.0
      %120 = vmatpush1.msra.mxu0 %v78
      %121 = vmatprep.subr.mxu0 0.0
      %122 = vmatpush1.msra.mxu0 %v77
      %123 = vmatprep.subr.mxu0 0.0
      %124 = vmatpush2.msra.mxu0 0.0
      %125 = vmatprep.subr.mxu0 0.0
      %126 = vmatpush2.msra.mxu0 0.0
      %127 = vmatprep.subr.mxu0 0.0
      %128 = vmatpush2.msra.mxu0 0.0
      %129 = vmatprep.subr.mxu0 0.0
      %130 = vmatpush2.msra.mxu0 0.0
      %131 = vmatprep.subr.mxu0 0.0
      %132 = vmatpush2.msra.mxu0 0.0
      %133 = vmatprep.subr.mxu0 0.0
      %134 = vmatpush2.msra.mxu0 0.0
      %135 = vmatprep.subr.mxu0 0.0
      %136 = vmatpush2.msra.mxu0 0.0
      %137 = vmatprep.subr.mxu0 0.0
      %138 = vmatpush2.msra.mxu0 0.0
      %139 = vmatprep.subr.mxu0 0.0
      %140 = vmatpush2.msra.mxu0 0.0
      %141 = vmatprep.subr.mxu0 0.0
      %142 = vmatpush2.msra.mxu0 0.0
      %143 = vmatprep.subr.mxu0 0.0
      %144 = vmatpush2.msra.mxu0 0.0
      %145 = vmatprep.subr.mxu0 0.0
      %146 = vmatpush2.msra.mxu0 0.0
      %147 = vmatprep.subr.mxu0 0.0
      %148 = vmatpush2.msra.mxu0 0.0
      %149 = vmatprep.subr.mxu0 0.0
      %150 = vmatpush2.msra.mxu0 0.0
      %151 = vmatprep.subr.mxu0 0.0
      %152 = vmatpush2.msra.mxu0 0.0
      %153 = vmatprep.subr.mxu0 0.0
      %154 = vmatpush2.msra.mxu0 0.0
      %155 = vmatprep.mubr.f32.mxu0 0.0
      %156 = vmatmul.mubr.f32.gmra.mxu0 %v89
      %v157 = vpop.f32.mrf.mxu0
      %v158 = vadd.f32 %v86, %v157
      %v159 = vpop.f32.mrf.mxu0
      %160 = vdwg.mxu0
      %vm161 = vcmask 15360
      %v162 = vsel %vm161, %v158, -inf
      %163 = vmax.xlane.f32.xlu0 %v162
      %v164 = vpop.xlane.xlu0 %163
      %v165 = vsub.f32 %v158, %v164
      %v166 = vmul.f32 %v165, 1.442695
      %v167 = vpow.pop %v166
      %v168 = vsel %vm161, %v167, 0.0
      %169 = vadd.xlane.f32.xlu0 %v168
      %v170 = vpop.xlane.xlu0 %169
      %v171 = vlog2.pop %v170
      %v172 = vmul.f32 %v171, 0.6931472
      %v173 = vsub.f32 %v165, %v172
      %174 = vst.msk [vmem:[%s4] sm:$0xff] %vm161, %v173
    $region29: #{tpu_custom_call.1} parent=1 // pred_fallthru
      _
    // Predicated region
    $region30: #{tpu_custom_call.1} parent=1 // pred_check
      _
    $region31: #{tpu_custom_call.1} parent=1 // pred_check_branch
      %176 = sbr.rel (0) target = $region33
    $region32: #{tpu_custom_call.1} parent=1 // pred_region
      _
    $region33: #{tpu_custom_call.1} parent=1 // pred_fallthru
      _
    // Predicated region
    $region34: #{tpu_custom_call.1} parent=1 // pred_check
      _
    $region35: #{tpu_custom_call.1} parent=1 // pred_check_branch
      %178 = sbr.rel (0) target = $region37
    $region36: #{tpu_custom_call.1} parent=1 // pred_region
      _
    $region37: #{tpu_custom_call.1} parent=1 // pred_fallthru
      _
    %179 = vsyncpa [#allocation4], 1

</llo_original>
